<compile_context>
chip_gen: v5e
topology: v5e:2x2
jax: 0.10.0
libtpu: 0.0.40
codegen_flags: <defaults>
</compile_context>

<pallas_src>
import functools

import jax
import jax.numpy as jnp
from jax.experimental import pallas as pl
from jax.experimental.pallas import tpu as pltpu

LANES = 128  # TPU lane width


def _round_up(n, m):
    return (n + m - 1) // m * m


def _mlp_kernel(x_ref, w_ref, b_ref, o_ref, *, d_in, off_w2, off_w3):
    # x_ref : [TB, d_in]        bf16   (batch tile)
    # w_ref : [rows, 128]       bf16   (packed, zero-padded weights; resident)
    # b_ref : [8, 128]          f32    (packed, zero-padded biases; resident)
    # o_ref : [TB, 128]         f32    (lane-dense output tile; cols >= 2 are 0)
    x = x_ref[...]

    # Layer 1: Linear + ReLU  ([TB, d_in] @ [d_in, 128] -> [TB, 128])
    w1 = w_ref[0:d_in, :]
    h = jnp.dot(x, w1, preferred_element_type=jnp.float32)
    h = jnp.maximum(h + b_ref[0:1, :], 0.0)  # f32 bias + ReLU on VPU

    # Layer 2: Linear + ReLU  ([TB, 128] @ [128, 128] -> [TB, 128])
    w2 = w_ref[off_w2:off_w2 + LANES, :]
    h = jnp.dot(h.astype(jnp.bfloat16), w2, preferred_element_type=jnp.float32)
    h = jnp.maximum(h + b_ref[1:2, :], 0.0)

    # Layer 3: Linear (logits live in cols [0, d_out); pad cols stay 0)
    w3 = w_ref[off_w3:off_w3 + LANES, :]
    out = jnp.dot(h.astype(jnp.bfloat16), w3, preferred_element_type=jnp.float32)
    out = out + b_ref[2:3, :]

    o_ref[...] = out.astype(o_ref.dtype)  # unmasked, lane-dense store


def pack_params(params):
    """Pack the 6 nn.Linear tensors into one bf16 weight buffer + one f32 bias buffer.

    Weights are stored [in, out] (so the kernel does x @ W), zero-padded to 128
    output lanes, and stacked along rows at 16-row-aligned offsets (clean bf16
    sublane tiling).  Zero padding keeps the math exact: padded columns stay 0
    through ReLU and contribute nothing to the next contraction.
    """
    w1, b1 = params["w1"], params["b1"]
    w2, b2 = params["w2"], params["b2"]
    w3, b3 = params["w3"], params["b3"]
    d_in, h0 = w1.shape
    _, h1 = w2.shape
    _, d_out = w3.shape
    assert h0 <= LANES and h1 <= LANES and d_out <= LANES

    off_w2 = _round_up(d_in, 16)
    off_w3 = off_w2 + LANES
    rows = off_w3 + LANES

    wbuf = jnp.zeros((rows, LANES), jnp.bfloat16)
    wbuf = wbuf.at[0:d_in, 0:h0].set(w1.astype(jnp.bfloat16))
    wbuf = wbuf.at[off_w2:off_w2 + h0, 0:h1].set(w2.astype(jnp.bfloat16))
    wbuf = wbuf.at[off_w3:off_w3 + h1, 0:d_out].set(w3.astype(jnp.bfloat16))

    bbuf = jnp.zeros((8, LANES), jnp.float32)
    bbuf = bbuf.at[0, 0:h0].set(b1.reshape(-1).astype(jnp.float32))
    bbuf = bbuf.at[1, 0:h1].set(b2.reshape(-1).astype(jnp.float32))
    bbuf = bbuf.at[2, 0:d_out].set(b3.reshape(-1).astype(jnp.float32))

    meta = {"d_in": d_in, "d_out": d_out, "off_w2": off_w2, "off_w3": off_w3}
    return wbuf, bbuf, meta


def choro_mlp_forward(x, params, *, block_b=512):
    """x: [B, input_size] float32.  params: dict of w1,b1,w2,b2,w3,b3."""
    wbuf, bbuf, meta = pack_params(params)
    B, d_in = x.shape
    assert d_in == meta["d_in"]
    d_out = meta["d_out"]

    # Batch tile: large (512 rows) for pipelining, shrunk for tiny batches.
    tb = min(block_b, _round_up(B, 8))
    grid = (pl.cdiv(B, tb),)

    kernel = functools.partial(
        _mlp_kernel,
        d_in=d_in,
        off_w2=meta["off_w2"],
        off_w3=meta["off_w3"],
    )

    out_padded = pl.pallas_call(
        kernel,
        out_shape=jax.ShapeDtypeStruct((B, LANES), jnp.float32),
        grid=grid,
        in_specs=[
            # x: streamed batch tiles (bf16 halves HBM read traffic).
            pl.BlockSpec((tb, d_in), lambda i: (i, 0)),
            # Packed weights / biases: constant block index -> resident in VMEM.
            pl.BlockSpec(wbuf.shape, lambda i: (0, 0)),
            pl.BlockSpec(bbuf.shape, lambda i: (0, 0)),
        ],
        out_specs=pl.BlockSpec((tb, LANES), lambda i: (i, 0)),
        compiler_params=pltpu.CompilerParams(
            dimension_semantics=("parallel",),  # megacore sharding on v7x
        ),
    )(x.astype(jnp.bfloat16), wbuf, bbuf)

    # Wrapper-side slice of the lane-dense output slab (free layout plumbing).
    return out_padded[:, :d_out]


def init_params(key, input_size, hidden_sizes):
    """Deterministic init mirroring nn.Linear shapes (weights stored [in, out])."""
    h0, h1 = hidden_sizes
    out_dim = 2
    ks = jax.random.split(key, 6)

    def uniform_init(k, fan_in, shape):
        # PyTorch nn.Linear default: U(-1/sqrt(fan_in), 1/sqrt(fan_in))
        bound = 1.0 / jnp.sqrt(jnp.float32(fan_in))
        return jax.random.uniform(k, shape, jnp.float32, -bound, bound)

    return {
        "w1": uniform_init(ks[0], input_size, (input_size, h0)),
        "b1": uniform_init(ks[1], input_size, (1, h0)),
        "w2": uniform_init(ks[2], h0, (h0, h1)),
        "b2": uniform_init(ks[3], h0, (1, h1)),
        "w3": uniform_init(ks[4], h1, (h1, out_dim)),
        "b3": uniform_init(ks[5], h1, (1, out_dim)),
    }


def reference_forward(x, p):
    h1 = jnp.maximum(x @ p["w1"] + p["b1"], 0.0)
    h2 = jnp.maximum(h1 @ p["w2"] + p["b2"], 0.0)
    return h2 @ p["w3"] + p["b3"]


if __name__ == "__main__":
    key = jax.random.PRNGKey(0)
    k_x, k_p, k_x2 = jax.random.split(key, 3)

    input_size = 16
    hidden_sizes = (32, 32)
    params = init_params(k_p, input_size, hidden_sizes)

    fwd = jax.jit(choro_mlp_forward)

    # Small batch (single tile).
    x_small = jax.random.normal(k_x, (8, input_size), dtype=jnp.float32)
    out_small = jax.block_until_ready(fwd(x_small, params))
    ref_small = reference_forward(x_small, params)
    assert out_small.shape == (8, 2)
    assert jnp.allclose(out_small, ref_small, atol=5e-2, rtol=5e-2), (
        float(jnp.max(jnp.abs(out_small - ref_small))))

    # Larger batch exercising the pipelined batch grid (2 tiles, partial last tile).
    x_big = jax.random.normal(k_x2, (1000, input_size), dtype=jnp.float32)
    out_big = jax.block_until_ready(fwd(x_big, params))
    ref_big = reference_forward(x_big, params)
    assert out_big.shape == (1000, 2)
    assert jnp.allclose(out_big, ref_big, atol=5e-2, rtol=5e-2), (
        float(jnp.max(jnp.abs(out_big - ref_big))))

    print("KERNEL_OK")
</pallas_src>

<mosaic_0001>
module attributes {stable_mosaic.version = 11 : i64} {
  func.func @_mlp_kernel(%arg0: i32, %arg1: memref<8x16xbf16, #tpu.memory_space<vmem>>, %arg2: memref<272x128xbf16, #tpu.memory_space<vmem>>, %arg3: memref<8x128xf32, #tpu.memory_space<vmem>>, %arg4: memref<8x128xf32, #tpu.memory_space<vmem>>) attributes {dimension_semantics = [#tpu.dimension_semantics<parallel>], iteration_bounds = array<i64: 1>, scalar_prefetch = 0 : i64, scratch_operands = 0 : i64, tpu.core_type = #tpu.core_type<tc>, window_params = [{transform_indices = @transform_0, window_bounds = array<i64: 8, 16>}, {pipeline_mode = #tpu.pipeline_mode<synchronous>, transform_indices = @transform_1, window_bounds = array<i64: 272, 128>}, {pipeline_mode = #tpu.pipeline_mode<synchronous>, transform_indices = @transform_2, window_bounds = array<i64: 8, 128>}, {transform_indices = @transform_3, window_bounds = array<i64: 8, 128>}]} {
    %c0 = arith.constant 0 : index
    %c0_0 = arith.constant 0 : index
    %0 = vector.load %arg1[%c0, %c0_0] : memref<8x16xbf16, #tpu.memory_space<vmem>>, vector<8x16xbf16>
    %c0_1 = arith.constant 0 : index
    %c0_2 = arith.constant 0 : index
    %1 = vector.load %arg2[%c0_1, %c0_2] : memref<272x128xbf16, #tpu.memory_space<vmem>>, vector<16x128xbf16>
    %cst = arith.constant dense<0.000000e+00> : vector<8x128xf32>
    %2 = tpu.matmul %0, %1, %cst {dimension_numbers = #tpu.dot_dimension_numbers<[1], [0], [0], [1], [0, 0, 1, 1], [], []>} : vector<8x16xbf16>, vector<16x128xbf16>, vector<8x128xf32> -> vector<8x128xf32>
    %c0_3 = arith.constant 0 : index
    %c0_4 = arith.constant 0 : index
    %3 = vector.load %arg3[%c0_3, %c0_4] : memref<8x128xf32, #tpu.memory_space<vmem>>, vector<1x128xf32>
    %4 = vector.broadcast %3 : vector<1x128xf32> to vector<8x128xf32>
    %5 = arith.addf %2, %4 : vector<8x128xf32>
    %cst_5 = arith.constant 0.000000e+00 : f32
    %6 = vector.broadcast %cst_5 : f32 to vector<8x128xf32>
    %7 = arith.maximumf %5, %6 : vector<8x128xf32>
    %c16 = arith.constant 16 : index
    %c0_6 = arith.constant 0 : index
    %8 = vector.load %arg2[%c16, %c0_6] : memref<272x128xbf16, #tpu.memory_space<vmem>>, vector<128x128xbf16>
    %9 = arith.truncf %7 : vector<8x128xf32> to vector<8x128xbf16>
    %cst_7 = arith.constant dense<0.000000e+00> : vector<8x128xf32>
    %10 = tpu.matmul %9, %8, %cst_7 {dimension_numbers = #tpu.dot_dimension_numbers<[1], [0], [0], [1], [0, 0, 1, 1], [], []>} : vector<8x128xbf16>, vector<128x128xbf16>, vector<8x128xf32> -> vector<8x128xf32>
    %c1 = arith.constant 1 : index
    %c0_8 = arith.constant 0 : index
    %11 = vector.load %arg3[%c1, %c0_8] : memref<8x128xf32, #tpu.memory_space<vmem>>, vector<1x128xf32>
    %12 = vector.broadcast %11 : vector<1x128xf32> to vector<8x128xf32>
    %13 = arith.addf %10, %12 : vector<8x128xf32>
    %cst_9 = arith.constant 0.000000e+00 : f32
    %14 = vector.broadcast %cst_9 : f32 to vector<8x128xf32>
    %15 = arith.maximumf %13, %14 : vector<8x128xf32>
    %c144 = arith.constant 144 : index
    %c0_10 = arith.constant 0 : index
    %16 = vector.load %arg2[%c144, %c0_10] : memref<272x128xbf16, #tpu.memory_space<vmem>>, vector<128x128xbf16>
    %17 = arith.truncf %15 : vector<8x128xf32> to vector<8x128xbf16>
    %cst_11 = arith.constant dense<0.000000e+00> : vector<8x128xf32>
    %18 = tpu.matmul %17, %16, %cst_11 {dimension_numbers = #tpu.dot_dimension_numbers<[1], [0], [0], [1], [0, 0, 1, 1], [], []>} : vector<8x128xbf16>, vector<128x128xbf16>, vector<8x128xf32> -> vector<8x128xf32>
    %c2 = arith.constant 2 : index
    %c0_12 = arith.constant 0 : index
    %19 = vector.load %arg3[%c2, %c0_12] : memref<8x128xf32, #tpu.memory_space<vmem>>, vector<1x128xf32>
    %20 = vector.broadcast %19 : vector<1x128xf32> to vector<8x128xf32>
    %21 = arith.addf %18, %20 : vector<8x128xf32>
    %c0_13 = arith.constant 0 : index
    %c0_14 = arith.constant 0 : index
    %22 = vector.load %arg4[%c0_13, %c0_14] : memref<8x128xf32, #tpu.memory_space<vmem>>, vector<8x128xf32>
    tpu.vector_store %arg4[%c0_13, %c0_14], %21 {strides = array<i32>} : memref<8x128xf32, #tpu.memory_space<vmem>>, vector<8x128xf32>,
    return
  }
  func.func @transform_0(%arg0: i32) -> (i32, i32) {
    %c0_i32 = arith.constant 0 : i32
    %c0_i32_0 = arith.constant 0 : i32
    return %arg0, %c0_i32 : i32, i32
  }
  func.func @transform_1(%arg0: i32) -> (i32, i32) {
    %c0_i32 = arith.constant 0 : i32
    %c0_i32_0 = arith.constant 0 : i32
    %c0_i32_1 = arith.constant 0 : i32
    return %c0_i32, %c0_i32_0 : i32, i32
  }
  func.func @transform_2(%arg0: i32) -> (i32, i32) {
    %c0_i32 = arith.constant 0 : i32
    %c0_i32_0 = arith.constant 0 : i32
    %c0_i32_1 = arith.constant 0 : i32
    return %c0_i32, %c0_i32_0 : i32, i32
  }
  func.func @transform_3(%arg0: i32) -> (i32, i32) {
    %c0_i32 = arith.constant 0 : i32
    %c0_i32_0 = arith.constant 0 : i32
    return %arg0, %c0_i32 : i32, i32
  }
}

</mosaic_0001>

<llo_original>
// kernel: choro_mlp_forward.1
$region0: #{choro_mlp_forward.1}
  #allocation0 [shape = 'u32[]', space=smem, size = 0x4, offset = 0x4, fixed_abs, tag = 'smem constant byte address 0x4 - core index']
  #allocation1 [shape = 'u32[72,128]{1,0:T(1,128)}', space=vmem, size = 0x9000, scoped, tag = 'internal scratch']
  %s0 = inlined_call_operand.vmem [shape: bf16[8,16], index: 0, kind: input, shape index: {}]
  %s1 = inlined_call_operand.vmem [shape: bf16[272,128], index: 1, kind: input, shape index: {}]
  %s2 = inlined_call_operand.vmem [shape: f32[8,128], index: 2, kind: input, shape index: {}]
  %s3 = inlined_call_operand.vmem [shape: f32[8,128], index: 3, kind: output, shape index: {}]
  %s4 = sld [smem:[#allocation0]]
  $region22: #{choro_mlp_forward.1} parent=0
    _
  %s6 = ssub.s32 1, %s4
  %s7 = scalar_select 0, %s6, %s4
  // Predicated region
  $region2: #{choro_mlp_forward.1} parent=0 // pred_check
    _
  $region3: #{choro_mlp_forward.1} parent=0 // pred_check_branch
    %9 = sbr.rel (0) target = $region5
  $region4: #{choro_mlp_forward.1} parent=0 // pred_region
    _
  $region5: #{choro_mlp_forward.1} parent=0 // pred_fallthru
    _
  // Predicated region
  $region6: #{choro_mlp_forward.1} parent=0 // pred_check
    _
  $region7: #{choro_mlp_forward.1} parent=0 // pred_check_branch
    %11 = sbr.rel (0) target = $region9
  $region8: #{choro_mlp_forward.1} parent=0 // pred_region
    _
  $region9: #{choro_mlp_forward.1} parent=0 // pred_fallthru
    _
  // Predicated region
  $region10: #{choro_mlp_forward.1} parent=0 // pred_check
    _
  $region11: #{choro_mlp_forward.1} parent=0 // pred_check_branch
    %13 = sbr.rel (0) target = $region13
  $region12: #{choro_mlp_forward.1} parent=0 // pred_region
    _
  $region13: #{choro_mlp_forward.1} parent=0 // pred_fallthru
    _
  %v15 = vld [vmem:[%s0] sm:$0xf]
  %v16 = vld [vmem:[%s1] sm:$0xf]
  %v17 = vld [vmem:[%s1 + $0x4] sm:$0xf]
  %v18 = vld [vmem:[%s2] sm:$0x1]
  %v19 = vperm.slane %v18, 0
  %v22 = vunpack.c.l.b16 %v16
  %v23 = vunpack.c.l.b16 %v17
  %v24 = vpack.c.b16 %v23, %v22
  %vm26 = vcmask 130048
  %v28 = vsel %vm26, %v15, 0
  %30 = vmatpush.bf16.msra.mxu0 0
  %31 = vmatpush.bf16.msra.mxu0 0
  %32 = vmatpush.bf16.msra.mxu0 0
  %33 = vmatpush.bf16.msra.mxu0 0
  %34 = vmatpush.bf16.msra.mxu0 0
  %35 = vmatpush.bf16.msra.mxu0 0
  %36 = vmatpush.bf16.msra.mxu0 0
  %37 = vmatpush.bf16.msra.mxu0 %v24
  %38 = vmatmul.bf16.gmra.mxu0 %v28
  %v39 = vpop.f32.mrf.mxu0
  %v40 = vadd.f32 %v19, %v39
  %v41 = vpop.f32.mrf.mxu0
  %42 = vdwg.mxu0
  %v43 = vmax.f32 %v40, 0.0
  %v44 = vld [vmem:[%s1 + $0x8] sm:$0xf]
  %v45 = vld [vmem:[%s1 + $0xc] sm:$0xf]
  %v46 = vld [vmem:[%s1 + $0x10] sm:$0xf]
  %v47 = vld [vmem:[%s1 + $0x14] sm:$0xf]
  %v48 = vld [vmem:[%s1 + $0x18] sm:$0xf]
  %v49 = vld [vmem:[%s1 + $0x1c] sm:$0xf]
  %v50 = vld [vmem:[%s1 + $0x20] sm:$0xf]
  %v51 = vld [vmem:[%s1 + $0x24] sm:$0xf]
  %v52 = vld [vmem:[%s1 + $0x28] sm:$0xf]
  %v53 = vld [vmem:[%s1 + $0x2c] sm:$0xf]
  %v54 = vld [vmem:[%s1 + $0x30] sm:$0xf]
  %v55 = vld [vmem:[%s1 + $0x34] sm:$0xf]
  %v56 = vld [vmem:[%s1 + $0x38] sm:$0xf]
  %v57 = vld [vmem:[%s1 + $0x3c] sm:$0xf]
  %v58 = vld [vmem:[%s1 + $0x40] sm:$0xf]
  %v59 = vld [vmem:[%s1 + $0x44] sm:$0xf]
  %v60 = vpack.c.bf16 %v43, %v43
  %v61 = vld [vmem:[%s2 + $0x1] sm:$0x1]
  %v62 = vperm.slane %v61, 0
  %v79 = vunpack.c.l.b16 %v44
  %v80 = vunpack.c.l.b16 %v45
  %v81 = vunpack.c.l.b16 %v46
  %v82 = vunpack.c.l.b16 %v47
  %v83 = vunpack.c.l.b16 %v48
  %v84 = vunpack.c.l.b16 %v49
  %v85 = vunpack.c.l.b16 %v50
  %v86 = vunpack.c.l.b16 %v51
  %v87 = vunpack.c.l.b16 %v52
  %v88 = vunpack.c.l.b16 %v53
  %v89 = vunpack.c.l.b16 %v54
  %v90 = vunpack.c.l.b16 %v55
  %v91 = vunpack.c.l.b16 %v56
  %v92 = vunpack.c.l.b16 %v57
  %v93 = vunpack.c.l.b16 %v58
  %v94 = vunpack.c.l.b16 %v59
  %v95 = vpack.c.b16 %v80, %v79
  %v96 = vpack.c.b16 %v82, %v81
  %v97 = vpack.c.b16 %v84, %v83
  %v98 = vpack.c.b16 %v86, %v85
  %v99 = vpack.c.b16 %v88, %v87
  %v100 = vpack.c.b16 %v90, %v89
  %v101 = vpack.c.b16 %v92, %v91
  %v102 = vpack.c.b16 %v94, %v93
  %111 = vmatpush.bf16.msra.mxu0 %v102
  %112 = vmatpush.bf16.msra.mxu0 %v101
  %113 = vmatpush.bf16.msra.mxu0 %v100
  %114 = vmatpush.bf16.msra.mxu0 %v99
  %115 = vmatpush.bf16.msra.mxu0 %v98
  %116 = vmatpush.bf16.msra.mxu0 %v97
  %117 = vmatpush.bf16.msra.mxu0 %v96
  %118 = vmatpush.bf16.msra.mxu0 %v95
  %119 = vmatmul.bf16.gmra.mxu0 %v60
  %v120 = vpop.f32.mrf.mxu0
  %v121 = vadd.f32 %v62, %v120
  %v122 = vpop.f32.mrf.mxu0
  %123 = vdwg.mxu0
  %v124 = vmax.f32 %v121, 0.0
  %v125 = vld [vmem:[%s1 + $0x48] sm:$0xf]
  %v126 = vld [vmem:[%s1 + $0x4c] sm:$0xf]
  %v127 = vld [vmem:[%s1 + $0x50] sm:$0xf]
  %v128 = vld [vmem:[%s1 + $0x54] sm:$0xf]
  %v129 = vld [vmem:[%s1 + $0x58] sm:$0xf]
  %v130 = vld [vmem:[%s1 + $0x5c] sm:$0xf]
  %v131 = vld [vmem:[%s1 + $0x60] sm:$0xf]
  %v132 = vld [vmem:[%s1 + $0x64] sm:$0xf]
  %v133 = vld [vmem:[%s1 + $0x68] sm:$0xf]
  %v134 = vld [vmem:[%s1 + $0x6c] sm:$0xf]
  %v135 = vld [vmem:[%s1 + $0x70] sm:$0xf]
  %v136 = vld [vmem:[%s1 + $0x74] sm:$0xf]
  %v137 = vld [vmem:[%s1 + $0x78] sm:$0xf]
  %v138 = vld [vmem:[%s1 + $0x7c] sm:$0xf]
  %v139 = vld [vmem:[%s1 + $0x80] sm:$0xf]
  %v140 = vld [vmem:[%s1 + $0x84] sm:$0xf]
  %v141 = vpack.c.bf16 %v124, %v124
  %v142 = vld [vmem:[%s2 + $0x2] sm:$0x1]
  %v143 = vperm.slane %v142, 0
  %v160 = vunpack.c.l.b16 %v125
  %v161 = vunpack.c.l.b16 %v126
  %v162 = vunpack.c.l.b16 %v127
  %v163 = vunpack.c.l.b16 %v128
  %v164 = vunpack.c.l.b16 %v129
  %v165 = vunpack.c.l.b16 %v130
  %v166 = vunpack.c.l.b16 %v131
  %v167 = vunpack.c.l.b16 %v132
  %v168 = vunpack.c.l.b16 %v133
  %v169 = vunpack.c.l.b16 %v134
  %v170 = vunpack.c.l.b16 %v135
  %v171 = vunpack.c.l.b16 %v136
  %v172 = vunpack.c.l.b16 %v137
  %v173 = vunpack.c.l.b16 %v138
  %v174 = vunpack.c.l.b16 %v139
  %v175 = vunpack.c.l.b16 %v140
  %v176 = vpack.c.b16 %v161, %v160
  %v177 = vpack.c.b16 %v163, %v162
  %v178 = vpack.c.b16 %v165, %v164
  %v179 = vpack.c.b16 %v167, %v166
  %v180 = vpack.c.b16 %v169, %v168
  %v181 = vpack.c.b16 %v171, %v170
  %v182 = vpack.c.b16 %v173, %v172
  %v183 = vpack.c.b16 %v175, %v174
  %192 = vmatpush.bf16.msra.mxu0 %v183
  %193 = vmatpush.bf16.msra.mxu0 %v182
  %194 = vmatpush.bf16.msra.mxu0 %v181
  %195 = vmatpush.bf16.msra.mxu0 %v180
  %196 = vmatpush.bf16.msra.mxu0 %v179
  %197 = vmatpush.bf16.msra.mxu0 %v178
  %198 = vmatpush.bf16.msra.mxu0 %v177
  %199 = vmatpush.bf16.msra.mxu0 %v176
  %200 = vmatmul.bf16.gmra.mxu0 %v141
  %v201 = vpop.f32.mrf.mxu0
  %v202 = vadd.f32 %v143, %v201
  %v203 = vpop.f32.mrf.mxu0
  %204 = vdwg.mxu0
  %205 = vst [vmem:[%s3] sm:$0xff] %v202
  // Predicated region
  $region14: #{choro_mlp_forward.1} parent=0 // pred_check
    _
  $region15: #{choro_mlp_forward.1} parent=0 // pred_check_branch
    %207 = sbr.rel (0) target = $region17
  $region16: #{choro_mlp_forward.1} parent=0 // pred_region
    _
  $region17: #{choro_mlp_forward.1} parent=0 // pred_fallthru
    _
  // Predicated region
  $region18: #{choro_mlp_forward.1} parent=0 // pred_check
    _
  $region19: #{choro_mlp_forward.1} parent=0 // pred_check_branch
    %209 = sbr.rel (0) target = $region21
  $region20: #{choro_mlp_forward.1} parent=0 // pred_region
    _
  $region21: #{choro_mlp_forward.1} parent=0 // pred_fallthru
    _

</llo_original>
